<compile_context>
chip_gen: v7x
topology: tpu7x:2x2x1
jax: 0.10.0
libtpu: 0.0.40
codegen_flags: <defaults>
</compile_context>

<pallas_src>
import functools

import jax
import jax.numpy as jnp
from jax import lax
from jax.experimental import pallas as pl
from jax.experimental.pallas import tpu as pltpu


def _round_up(x, m):
    return ((x + m - 1) // m) * m


def critic_kernel(obs_ref, act_ref, w1_ref, b1_ref, w2_ref, b2_ref,
                  w3_ref, b3_ref, o_ref):
    """3-layer MLP on one batch tile, fully resident in VMEM.

    MXU: one K=32 push for layer 1 (torch.cat folded into an in-VMEM concat),
    the dominant [B,256]x[256,256] layer-2 matmul, and a (1,256)x(B,256)^T push
    for layer 3 that directly produces the lane-dense output row.
    bf16 inputs / f32 accumulation; bias + ReLU stay in f32 on the VPU.
    """
    # Layer 1: fold the concat into VMEM (concat in f32, then one bf16 MXU push).
    x = jnp.concatenate(
        [obs_ref[...].astype(jnp.float32), act_ref[...].astype(jnp.float32)],
        axis=-1).astype(jnp.bfloat16)
    h1 = jnp.dot(x, w1_ref[...], preferred_element_type=jnp.float32) + b1_ref[...]
    h1 = jnp.maximum(h1, 0.0)

    # Layer 2: the dominant [B,256] x [256,256] matmul.
    h2 = jnp.dot(h1.astype(jnp.bfloat16), w2_ref[...],
                 preferred_element_type=jnp.float32) + b2_ref[...]
    h2 = jnp.maximum(h2, 0.0)

    # Layer 3 (256 -> 1): contract the last dims of w3 (1,256) and h2 (B,256) so
    # the result is already a lane-dense (1, B) row (batch in lanes) -> the store
    # is full-lane-width, no masked width-1 vst.
    q_row = lax.dot_general(
        w3_ref[...], h2.astype(jnp.bfloat16),
        dimension_numbers=(((1,), (1,)), ((), ())),
        preferred_element_type=jnp.float32) + b3_ref[...]
    o_ref[0] = q_row.astype(o_ref.dtype)


@functools.partial(jax.jit, static_argnames=("block_b",))
def critic_forward(obs, act, params, block_b=512):
    B, obs_dim = obs.shape
    _, act_dim = act.shape
    w1, b1, w2, b2, w3_row, b3 = params
    in_dim, H = w1.shape          # (obs_dim + act_dim, 256)

    # Tile policy (perf review):
    #  * B <= 128: one sublane-padded tile, single grid step.
    #  * B  > 128: 128-multiple row tiles sized so the grid has >= 2 steps
    #    (both v7x TensorCores get work via the "parallel" axis), capped at
    #    block_b (default 512) so large batches use few grid steps.
    block_b = max(128, _round_up(block_b, 128))
    if B <= 128:
        eff_block = _round_up(B, 8)
    else:
        eff_block = min(block_b, _round_up(pl.cdiv(B, 2), 128))
    num_tiles = pl.cdiv(B, eff_block)

    out = pl.pallas_call(
        critic_kernel,
        # Lane-dense output: one (1, eff_block) row per tile; reshaped to (B, 1) below.
        out_shape=jax.ShapeDtypeStruct((num_tiles, 1, eff_block), jnp.float32),
        grid_spec=pltpu.PrefetchScalarGridSpec(
            num_scalar_prefetch=0,
            grid=(num_tiles,),
            in_specs=[
                pl.BlockSpec((eff_block, obs_dim), lambda i: (i, 0)),  # obs tile
                pl.BlockSpec((eff_block, act_dim), lambda i: (i, 0)),  # act tile
                pl.BlockSpec((in_dim, H), lambda i: (0, 0)),           # W1 (unsplit, resident)
                pl.BlockSpec((1, H), lambda i: (0, 0)),                # b1
                pl.BlockSpec((H, H), lambda i: (0, 0)),                # W2
                pl.BlockSpec((1, H), lambda i: (0, 0)),                # b2
                pl.BlockSpec((1, H), lambda i: (0, 0)),                # W3 as a row
                pl.BlockSpec((1, 1), lambda i: (0, 0)),                # b3
            ],
            out_specs=pl.BlockSpec((1, 1, eff_block), lambda i: (i, 0, 0)),
        ),
        compiler_params=pltpu.CompilerParams(
            dimension_semantics=("parallel",),
        ),
    )(obs, act, w1, b1, w2, b2, w3_row, b3)
    # (num_tiles, 1, eff_block) -> (B, 1); padded tail rows (if any) are dropped.
    return out.reshape(-1)[:B].reshape(B, 1)


def init_params(key, obs_dim, act_dim, hidden=256):
    """Deterministic synthetic parameters (shapes match the Critic's nn.Linear layers).

    MXU weights (W1, W2, W3-row) live in bf16; biases stay f32 (used on the VPU).
    """
    in_dim = obs_dim + act_dim
    k1, k2, k3, k4, k5, k6 = jax.random.split(key, 6)
    w1 = (jax.random.normal(k1, (in_dim, hidden), jnp.float32)
          * (1.0 / jnp.sqrt(in_dim))).astype(jnp.bfloat16)
    b1 = jax.random.normal(k4, (1, hidden), jnp.float32) * 0.05
    w2 = (jax.random.normal(k2, (hidden, hidden), jnp.float32)
          * (1.0 / jnp.sqrt(hidden))).astype(jnp.bfloat16)
    b2 = jax.random.normal(k5, (1, hidden), jnp.float32) * 0.05
    w3_row = (jax.random.normal(k3, (1, hidden), jnp.float32)
              * (1.0 / jnp.sqrt(hidden))).astype(jnp.bfloat16)
    b3 = jax.random.normal(k6, (1, 1), jnp.float32) * 0.05
    return (w1, b1, w2, b2, w3_row, b3)


def critic_ref(obs, act, params):
    """Pure-JAX reference mirroring the kernel's bf16-in / f32-accumulate math."""
    w1, b1, w2, b2, w3_row, b3 = params
    x = jnp.concatenate([obs, act], axis=-1).astype(jnp.bfloat16)
    h1 = jnp.maximum(
        jnp.dot(x, w1, preferred_element_type=jnp.float32) + b1, 0.0)
    h2 = jnp.maximum(
        jnp.dot(h1.astype(jnp.bfloat16), w2, preferred_element_type=jnp.float32) + b2,
        0.0)
    return jnp.dot(h2.astype(jnp.bfloat16), w3_row.T,
                   preferred_element_type=jnp.float32) + b3


if __name__ == "__main__":
    key = jax.random.PRNGKey(0)
    k_obs, k_act, k_par, k_obs2, k_act2 = jax.random.split(key, 5)

    obs_dim, act_dim = 24, 8          # obs_dim + act_dim = 32
    params = init_params(k_par, obs_dim, act_dim)

    # Small RL-style batch: single grid step, everything resident in VMEM.
    batch = 8
    obs = jax.random.normal(k_obs, (batch, obs_dim), jnp.float32)
    act = jax.random.normal(k_act, (batch, act_dim), jnp.float32)
    q = jax.block_until_ready(critic_forward(obs, act, params))
    q_ref = critic_ref(obs, act, params)
    assert q.shape == (batch, 1), q.shape
    assert jnp.allclose(q, q_ref, atol=1e-2, rtol=1e-2), "mismatch vs reference (small batch)"

    # Mid-size batch that is NOT a multiple of the tile: exercises the >=2-step
    # parallel grid, 128-multiple lane-dense tiles, and padded-tail handling.
    batch2 = 300
    obs2 = jax.random.normal(k_obs2, (batch2, obs_dim), jnp.float32)
    act2 = jax.random.normal(k_act2, (batch2, act_dim), jnp.float32)
    q2 = jax.block_until_ready(critic_forward(obs2, act2, params))
    q2_ref = critic_ref(obs2, act2, params)
    assert q2.shape == (batch2, 1), q2.shape
    assert jnp.allclose(q2, q2_ref, atol=1e-2, rtol=1e-2), "mismatch vs reference (mid batch)"

    print("KERNEL_OK")
</pallas_src>

<mosaic_0001>
module attributes {stable_mosaic.version = 11 : i64} {
  func.func @critic_kernel(%arg0: i32, %arg1: memref<8x24xf32, #tpu.memory_space<vmem>>, %arg2: memref<8x8xf32, #tpu.memory_space<vmem>>, %arg3: memref<32x256xbf16, #tpu.memory_space<vmem>>, %arg4: memref<1x256xf32, #tpu.memory_space<vmem>>, %arg5: memref<256x256xbf16, #tpu.memory_space<vmem>>, %arg6: memref<1x256xf32, #tpu.memory_space<vmem>>, %arg7: memref<1x256xbf16, #tpu.memory_space<vmem>>, %arg8: memref<1x1xf32, #tpu.memory_space<vmem>>, %arg9: memref<1x1x8xf32, #tpu.memory_space<vmem>>) attributes {dimension_semantics = [#tpu.dimension_semantics<parallel>], iteration_bounds = array<i64: 1>, scalar_prefetch = 0 : i64, scratch_operands = 0 : i64, tpu.core_type = #tpu.core_type<tc>, window_params = [{transform_indices = @transform_0, window_bounds = array<i64: 8, 24>}, {transform_indices = @transform_1, window_bounds = array<i64: 8, 8>}, {pipeline_mode = #tpu.pipeline_mode<synchronous>, transform_indices = @transform_2, window_bounds = array<i64: 32, 256>}, {pipeline_mode = #tpu.pipeline_mode<synchronous>, transform_indices = @transform_3, window_bounds = array<i64: 1, 256>}, {pipeline_mode = #tpu.pipeline_mode<synchronous>, transform_indices = @transform_4, window_bounds = array<i64: 256, 256>}, {pipeline_mode = #tpu.pipeline_mode<synchronous>, transform_indices = @transform_5, window_bounds = array<i64: 1, 256>}, {pipeline_mode = #tpu.pipeline_mode<synchronous>, transform_indices = @transform_6, window_bounds = array<i64: 1, 256>}, {pipeline_mode = #tpu.pipeline_mode<synchronous>, transform_indices = @transform_7, window_bounds = array<i64: 1, 1>}, {transform_indices = @transform_8, window_bounds = array<i64: 1, 1, 8>}]} {
    %c0 = arith.constant 0 : index
    %c0_0 = arith.constant 0 : index
    %0 = vector.load %arg1[%c0, %c0_0] : memref<8x24xf32, #tpu.memory_space<vmem>>, vector<8x24xf32>
    %c0_1 = arith.constant 0 : index
    %c0_2 = arith.constant 0 : index
    %1 = vector.load %arg2[%c0_1, %c0_2] : memref<8x8xf32, #tpu.memory_space<vmem>>, vector<8x8xf32>
    %2 = tpu.concatenate %0, %1 in 1 : vector<8x24xf32>, vector<8x8xf32> -> vector<8x32xf32>
    %3 = arith.truncf %2 : vector<8x32xf32> to vector<8x32xbf16>
    %c0_3 = arith.constant 0 : index
    %c0_4 = arith.constant 0 : index
    %4 = vector.load %arg3[%c0_3, %c0_4] : memref<32x256xbf16, #tpu.memory_space<vmem>>, vector<32x256xbf16>
    %cst = arith.constant dense<0.000000e+00> : vector<8x256xf32>
    %5 = tpu.matmul %3, %4, %cst {dimension_numbers = #tpu.dot_dimension_numbers<[1], [0], [0], [1], [0, 0, 1, 1], [], []>} : vector<8x32xbf16>, vector<32x256xbf16>, vector<8x256xf32> -> vector<8x256xf32>
    %c0_5 = arith.constant 0 : index
    %c0_6 = arith.constant 0 : index
    %6 = vector.load %arg4[%c0_5, %c0_6] : memref<1x256xf32, #tpu.memory_space<vmem>>, vector<1x256xf32>
    %7 = vector.broadcast %6 : vector<1x256xf32> to vector<8x256xf32>
    %8 = arith.addf %5, %7 : vector<8x256xf32>
    %cst_7 = arith.constant 0.000000e+00 : f32
    %9 = vector.broadcast %cst_7 : f32 to vector<8x256xf32>
    %10 = arith.maximumf %8, %9 : vector<8x256xf32>
    %11 = arith.truncf %10 : vector<8x256xf32> to vector<8x256xbf16>
    %c0_8 = arith.constant 0 : index
    %c0_9 = arith.constant 0 : index
    %12 = vector.load %arg5[%c0_8, %c0_9] : memref<256x256xbf16, #tpu.memory_space<vmem>>, vector<256x256xbf16>
    %cst_10 = arith.constant dense<0.000000e+00> : vector<8x256xf32>
    %13 = tpu.matmul %11, %12, %cst_10 {dimension_numbers = #tpu.dot_dimension_numbers<[1], [0], [0], [1], [0, 0, 1, 1], [], []>} : vector<8x256xbf16>, vector<256x256xbf16>, vector<8x256xf32> -> vector<8x256xf32>
    %c0_11 = arith.constant 0 : index
    %c0_12 = arith.constant 0 : index
    %14 = vector.load %arg6[%c0_11, %c0_12] : memref<1x256xf32, #tpu.memory_space<vmem>>, vector<1x256xf32>
    %15 = vector.broadcast %14 : vector<1x256xf32> to vector<8x256xf32>
    %16 = arith.addf %13, %15 : vector<8x256xf32>
    %cst_13 = arith.constant 0.000000e+00 : f32
    %17 = vector.broadcast %cst_13 : f32 to vector<8x256xf32>
    %18 = arith.maximumf %16, %17 : vector<8x256xf32>
    %c0_14 = arith.constant 0 : index
    %c0_15 = arith.constant 0 : index
    %19 = vector.load %arg7[%c0_14, %c0_15] : memref<1x256xbf16, #tpu.memory_space<vmem>>, vector<1x256xbf16>
    %20 = arith.truncf %18 : vector<8x256xf32> to vector<8x256xbf16>
    %cst_16 = arith.constant dense<0.000000e+00> : vector<1x8xf32>
    %21 = tpu.matmul %19, %20, %cst_16 {dimension_numbers = #tpu.dot_dimension_numbers<[1], [1], [0], [0], [0, 0, 1, 0], [], []>} : vector<1x256xbf16>, vector<8x256xbf16>, vector<1x8xf32> -> vector<1x8xf32>
    %c0_17 = arith.constant 0 : index
    %c0_18 = arith.constant 0 : index
    %22 = vector.load %arg8[%c0_17, %c0_18] : memref<1x1xf32, #tpu.memory_space<vmem>>, vector<1x1xf32>
    %23 = vector.broadcast %22 : vector<1x1xf32> to vector<1x8xf32>
    %24 = arith.addf %21, %23 : vector<1x8xf32>
    %c0_19 = arith.constant 0 : index
    %c0_20 = arith.constant 0 : index
    %c0_21 = arith.constant 0 : index
    %25 = vector.load %arg9[%c0_19, %c0_20, %c0_21] : memref<1x1x8xf32, #tpu.memory_space<vmem>>, vector<1x1x8xf32>
    %26 = vector.shape_cast %25 : vector<1x1x8xf32> to vector<1x8xf32>
    %27 = vector.shape_cast %24 : vector<1x8xf32> to vector<1x1x8xf32>
    tpu.vector_store %arg9[%c0_19, %c0_20, %c0_21], %27 {strides = array<i32>} : memref<1x1x8xf32, #tpu.memory_space<vmem>>, vector<1x1x8xf32>,
    return
  }
  func.func @transform_0(%arg0: i32) -> (i32, i32) {
    %c0_i32 = arith.constant 0 : i32
    %c0_i32_0 = arith.constant 0 : i32
    return %arg0, %c0_i32 : i32, i32
  }
  func.func @transform_1(%arg0: i32) -> (i32, i32) {
    %c0_i32 = arith.constant 0 : i32
    %c0_i32_0 = arith.constant 0 : i32
    return %arg0, %c0_i32 : i32, i32
  }
  func.func @transform_2(%arg0: i32) -> (i32, i32) {
    %c0_i32 = arith.constant 0 : i32
    %c0_i32_0 = arith.constant 0 : i32
    %c0_i32_1 = arith.constant 0 : i32
    return %c0_i32, %c0_i32_0 : i32, i32
  }
  func.func @transform_3(%arg0: i32) -> (i32, i32) {
    %c0_i32 = arith.constant 0 : i32
    %c0_i32_0 = arith.constant 0 : i32
    %c0_i32_1 = arith.constant 0 : i32
    return %c0_i32, %c0_i32_0 : i32, i32
  }
  func.func @transform_4(%arg0: i32) -> (i32, i32) {
    %c0_i32 = arith.constant 0 : i32
    %c0_i32_0 = arith.constant 0 : i32
    %c0_i32_1 = arith.constant 0 : i32
    return %c0_i32, %c0_i32_0 : i32, i32
  }
  func.func @transform_5(%arg0: i32) -> (i32, i32) {
    %c0_i32 = arith.constant 0 : i32
    %c0_i32_0 = arith.constant 0 : i32
    %c0_i32_1 = arith.constant 0 : i32
    return %c0_i32, %c0_i32_0 : i32, i32
  }
  func.func @transform_6(%arg0: i32) -> (i32, i32) {
    %c0_i32 = arith.constant 0 : i32
    %c0_i32_0 = arith.constant 0 : i32
    %c0_i32_1 = arith.constant 0 : i32
    return %c0_i32, %c0_i32_0 : i32, i32
  }
  func.func @transform_7(%arg0: i32) -> (i32, i32) {
    %c0_i32 = arith.constant 0 : i32
    %c0_i32_0 = arith.constant 0 : i32
    %c0_i32_1 = arith.constant 0 : i32
    return %c0_i32, %c0_i32_0 : i32, i32
  }
  func.func @transform_8(%arg0: i32) -> (i32, i32, i32) {
    %c0_i32 = arith.constant 0 : i32
    %c0_i32_0 = arith.constant 0 : i32
    %c0_i32_1 = arith.constant 0 : i32
    return %arg0, %c0_i32, %c0_i32_0 : i32, i32, i32
  }
}

</mosaic_0001>

<llo_original>
// kernel: critic_forward.1
$region0: #{critic_forward.1}
  #allocation0 [shape = 'u32[]', space=smem, size = 0x4, offset = 0x4, fixed_abs, tag = 'smem constant byte address 0x4 - core index']
  #allocation1 [shape = 'u32[144,128]{1,0:T(1,128)}', space=vmem, size = 0x12000, scoped, tag = 'internal scratch']
  #allocation2 [shape = 'f32[1,1]{1,0:T(1,128)S(1)}', space=vmem, size = 0x200, scoped, tag = 'scoped memory for critic_forward.1']
  %s0 = inlined_call_operand.hbm [shape: f32[8,24], index: 0, kind: input, shape index: {}]
  %s1 = inlined_call_operand.hbm [shape: f32[8,8], index: 1, kind: input, shape index: {}]
  %s2 = inlined_call_operand.hbm [shape: bf16[32,256], index: 2, kind: input, shape index: {}]
  %s3 = inlined_call_operand.vmem [shape: f32[1,256], index: 3, kind: input, shape index: {}]
  %s4 = inlined_call_operand.hbm [shape: bf16[256,256], index: 4, kind: input, shape index: {}]
  %s5 = inlined_call_operand.vmem [shape: f32[1,256], index: 5, kind: input, shape index: {}]
  %s6 = inlined_call_operand.vmem [shape: bf16[1,256], index: 6, kind: input, shape index: {}]
  %s7 = inlined_call_operand.<no memory space> [shape: f32[1,1], index: 7, kind: input, shape index: {}]
  %s8 = inlined_call_operand.hbm [shape: f32[1,1,8], index: 8, kind: output, shape index: {}]
  %s9 = sld [smem:[#allocation0]]
  $region58: #{critic_forward.1} parent=0
    _
  %s11 = ssub.s32 1, %s9
  %s12 = scalar_select 0, %s11, %s9
  %v13 = vstv %s7
  %14 = vst [vmem:[#allocation2] sm:$0x1] %v13
  $region1: #{critic_forward.1} parent=0
    #allocation3 [shape = 'u8[4096]{0}', space=vmem, size = 0x1000, scoped, tag = 'input window, operand 0, single buffered']
    #allocation4 [shape = 's32[1]{0}', space=sflag, size = 0x4, scoped, tag = 'scoped memory for critic_forward.1']
    #allocation5 [shape = 's32[1]{0}', space=sflag, size = 0x4, scoped, tag = 'scoped memory for critic_forward.1']
    #allocation6 [shape = 'u8[4096]{0}', space=vmem, size = 0x1000, scoped, tag = 'input window, operand 1, single buffered']
    #allocation7 [shape = 's32[1]{0}', space=sflag, size = 0x4, scoped, tag = 'scoped memory for critic_forward.1']
    #allocation8 [shape = 'u8[16384]{0}', space=vmem, size = 0x4000, scoped, tag = 'input window, operand 2, single buffered']
    #allocation9 [shape = 'u8[131072]{0}', space=vmem, size = 0x20000, scoped, tag = 'input window, operand 4, single buffered']
    #allocation10 [shape = 's32[1]{0}', space=sflag, size = 0x4, scoped, tag = 'scoped memory for critic_forward.1']
    #allocation11 [shape = 'u8[512]{0}', space=vmem, size = 0x400, scoped, tag = 'output window, operand 0, single buffered']
    %15 = vsyncpa [#allocation4], 0
    %16 = vsyncpa [#allocation7], 0
    %17 = vsyncpa [#allocation10], 0
    %18 = vsyncpa [#allocation5], 0
    // Predicated region
    $region2: #{critic_forward.1} parent=1 // pred_check
      _
    $region3: #{critic_forward.1} parent=1 // pred_check_branch
      %20 = sbr.rel (0) target = $region5
    $region4: #{critic_forward.1} parent=1 // pred_region
      %s22 = ssub.s32 128, 128
      %23 = vsyncadd [#allocation4], %s22
      %s25 = sshll.u32 [#allocation3], 4
      %s26 = int_to_ptr.vmem [resolvable:$true] %s25
      %28 = dma.hbm_to_vmem [thread:$0]  %s0, 128, %s26, [#allocation4]
    $region5: #{critic_forward.1} parent=1 // pred_fallthru
      _
    // Predicated region
    $region6: #{critic_forward.1} parent=1 // pred_check
      _
    $region7: #{critic_forward.1} parent=1 // pred_check_branch
      %30 = sbr.rel (0) target = $region9
    $region8: #{critic_forward.1} parent=1 // pred_region
      %s32 = ssub.s32 128, 128
      %33 = vsyncadd [#allocation7], %s32
      %s35 = sshll.u32 [#allocation6], 4
      %s36 = int_to_ptr.vmem [resolvable:$true] %s35
      %38 = dma.hbm_to_vmem [thread:$0]  %s1, 128, %s36, [#allocation7]
    $region9: #{critic_forward.1} parent=1 // pred_fallthru
      _
    // Predicated region
    $region10: #{critic_forward.1} parent=1 // pred_check
      _
    $region11: #{critic_forward.1} parent=1 // pred_check_branch
      %40 = sbr.rel (0) target = $region13
    $region12: #{critic_forward.1} parent=1 // pred_region
      %s42 = ssub.s32 512, 512
      %43 = vsyncadd [#allocation7], %s42
      %s44 = sshll.u32 [#allocation8], 4
      %s45 = int_to_ptr.vmem [resolvable:$true] %s44
      %50 = dma.hbm_to_vmem [thread:$0]  %s2, 512, %s45, [#allocation7], 128, 128, 8
    $region13: #{critic_forward.1} parent=1 // pred_fallthru
      _
    // Predicated region
    $region14: #{critic_forward.1} parent=1 // pred_check
      _
    $region15: #{critic_forward.1} parent=1 // pred_check_branch
      %52 = sbr.rel (0) target = $region17
    $region16: #{critic_forward.1} parent=1 // pred_region
      _
    $region17: #{critic_forward.1} parent=1 // pred_fallthru
      _
    // Predicated region
    $region18: #{critic_forward.1} parent=1 // pred_check
      _
    $region19: #{critic_forward.1} parent=1 // pred_check_branch
      %54 = sbr.rel (0) target = $region21
    $region20: #{critic_forward.1} parent=1 // pred_region
      %s56 = ssub.s32 4096, 4096
      %57 = vsyncadd [#allocation10], %s56
      %s58 = sshll.u32 [#allocation9], 4
      %s59 = int_to_ptr.vmem [resolvable:$true] %s58
      %64 = dma.hbm_to_vmem [thread:$0]  %s4, 4096, %s59, [#allocation10], 128, 128, 8
    $region21: #{critic_forward.1} parent=1 // pred_fallthru
      _
    // Predicated region
    $region22: #{critic_forward.1} parent=1 // pred_check
      _
    $region23: #{critic_forward.1} parent=1 // pred_check_branch
      %66 = sbr.rel (0) target = $region25
    $region24: #{critic_forward.1} parent=1 // pred_region
      _
    $region25: #{critic_forward.1} parent=1 // pred_fallthru
      _
    // Predicated region
    $region26: #{critic_forward.1} parent=1 // pred_check
      _
    $region27: #{critic_forward.1} parent=1 // pred_check_branch
      %68 = sbr.rel (0) target = $region29
    $region28: #{critic_forward.1} parent=1 // pred_region
      _
    $region29: #{critic_forward.1} parent=1 // pred_fallthru
      _
    // Predicated region
    $region30: #{critic_forward.1} parent=1 // pred_check
      _
    $region31: #{critic_forward.1} parent=1 // pred_check_branch
      %70 = sbr.rel (0) target = $region33
    $region32: #{critic_forward.1} parent=1 // pred_region
      _
    $region33: #{critic_forward.1} parent=1 // pred_fallthru
      _
    // Predicated region
    $region34: #{critic_forward.1} parent=1 // pred_check
      _
    $region35: #{critic_forward.1} parent=1 // pred_check_branch
      %72 = sbr.rel (0) target = $region37
    $region36: #{critic_forward.1} parent=1 // pred_region
      %73 = dma.done [#allocation4], 128
    $region37: #{critic_forward.1} parent=1 // pred_fallthru
      _
    // Predicated region
    $region38: #{critic_forward.1} parent=1 // pred_check
      _
    $region39: #{critic_forward.1} parent=1 // pred_check_branch
      %75 = sbr.rel (0) target = $region41
    $region40: #{critic_forward.1} parent=1 // pred_region
      %76 = dma.done [#allocation7], 128
    $region41: #{critic_forward.1} parent=1 // pred_fallthru
      _
    // Predicated region
    $region42: #{critic_forward.1} parent=1 // pred_check
      _
    $region43: #{critic_forward.1} parent=1 // pred_check_branch
      %78 = sbr.rel (0) target = $region45
    $region44: #{critic_forward.1} parent=1 // pred_region
      %79 = dma.done [#allocation7], 512
    $region45: #{critic_forward.1} parent=1 // pred_fallthru
      _
    // Predicated region
    $region46: #{critic_forward.1} parent=1 // pred_check
      _
    $region47: #{critic_forward.1} parent=1 // pred_check_branch
      %81 = sbr.rel (0) target = $region49
    $region48: #{critic_forward.1} parent=1 // pred_region
      %82 = dma.done [#allocation10], 4096
    $region49: #{critic_forward.1} parent=1 // pred_fallthru
      _
    %v84 = vld [vmem:[#allocation3] sm:$0xff]
    %v85 = vld [vmem:[#allocation6] sm:$0xff]
    %87 = vrot.lane.b32.xlu0 %v85, 24
    %v88 = vpop.permute.xlu0 %87
    %vm90 = vcmask 195584
    %v91 = vsel %vm90, %v84, %v88
    %v92 = vpack.c.bf16 %v91, %v91
    %v93 = vld [vmem:[#allocation8] sm:$0xff]
    %v94 = vld [vmem:[#allocation8 + $0x8] sm:$0xff]
    %v95 = vld [vmem:[#allocation8 + $0x10] sm:$0xff]
    %v96 = vld [vmem:[#allocation8 + $0x18] sm:$0xff]
    %v97 = vld [vmem:[%s3] sm:$0x3]
    %v99 = vlaneseq
    %v100 = vshrl.u32 %v99, 7
    %v101 = vsub.s32 0, %v100
    %v102 = vrot.slane %v97, %v101
    %v103 = vlaneseq
    %v104 = vshrl.u32 %v103, 7
    %v105 = vsub.s32 1, %v104
    %v106 = vrot.slane %v97, %v105
    %v113 = vunpack.c.l.b16 %v93
    %v114 = vunpack.c.h.b16 %v93
    %v115 = vunpack.c.l.b16 %v94
    %v116 = vunpack.c.h.b16 %v94
    %v117 = vunpack.c.l.b16 %v95
    %v118 = vunpack.c.h.b16 %v95
    %v119 = vunpack.c.l.b16 %v96
    %v120 = vunpack.c.h.b16 %v96
    %v121 = vpack.c.b16 %v115, %v113
    %v122 = vpack.c.b16 %v116, %v114
    %v123 = vpack.c.b16 %v119, %v117
    %v124 = vpack.c.b16 %v120, %v118
    %vm129 = vcmask 261120
    %v131 = vsel %vm129, %v92, 0
    %133 = vmatprep.subr.bf16.mxu0 %v122
    %134 = vmatpush1.bf16.msra.mxu0 %v121
    %135 = vmatprep.subr.bf16.mxu0 %v124
    %136 = vmatpush1.bf16.msra.mxu0 %v123
    %137 = vmatprep.subr.bf16.mxu0 0
    %138 = vmatpush1.bf16.msra.mxu0 0
    %139 = vmatprep.subr.bf16.mxu0 0
    %140 = vmatpush1.bf16.msra.mxu0 0
    %141 = vmatprep.subr.bf16.mxu0 0
    %142 = vmatpush1.bf16.msra.mxu0 0
    %143 = vmatprep.subr.bf16.mxu0 0
    %144 = vmatpush1.bf16.msra.mxu0 0
    %145 = vmatprep.subr.bf16.mxu0 0
    %146 = vmatpush1.bf16.msra.mxu0 0
    %147 = vmatprep.subr.bf16.mxu0 0
    %148 = vmatpush1.bf16.msra.mxu0 0
    %149 = vmatprep.subr.bf16.mxu0 0
    %150 = vmatpush1.bf16.msra.mxu0 0
    %151 = vmatprep.subr.bf16.mxu0 0
    %152 = vmatpush1.bf16.msra.mxu0 0
    %153 = vmatprep.subr.bf16.mxu0 0
    %154 = vmatpush1.bf16.msra.mxu0 0
    %155 = vmatprep.subr.bf16.mxu0 0
    %156 = vmatpush1.bf16.msra.mxu0 0
    %157 = vmatprep.subr.bf16.mxu0 0
    %158 = vmatpush1.bf16.msra.mxu0 0
    %159 = vmatprep.subr.bf16.mxu0 0
    %160 = vmatpush1.bf16.msra.mxu0 0
    %161 = vmatprep.subr.bf16.mxu0 0
    %162 = vmatpush1.bf16.msra.mxu0 0
    %163 = vmatprep.subr.bf16.mxu0 0
    %164 = vmatpush1.bf16.msra.mxu0 0
    %165 = vmatprep.mubr.bf16.mxu0 0
    %166 = vmatmul.mubr.bf16.gmra.mrb[0].mxu0 %v131
    %v167 = vpop.f32.mrb[0].mxu0
    %v168 = vadd.f32 %v102, %v167
    %v169 = vpop.f32.mrb[0].mxu0
    %v170 = vadd.f32 %v106, %v169
    %v171 = vpop.f32.mrb[0].mxu0
    %v172 = vpop.f32.mrb[0].mxu0
    %173 = vdwg.mxu0
    %v174 = vmax.f32 %v168, 0.0
    %v175 = vmax.f32 %v170, 0.0
    %v176 = vpack.c.bf16 %v174, %v174
    %v177 = vpack.c.bf16 %v175, %v175
    %v178 = vld [vmem:[#allocation9] sm:$0xff]
    %v179 = vld [vmem:[#allocation9 + $0x8] sm:$0xff]
    %v180 = vld [vmem:[#allocation9 + $0x10] sm:$0xff]
    %v181 = vld [vmem:[#allocation9 + $0x18] sm:$0xff]
    %v182 = vld [vmem:[#allocation9 + $0x20] sm:$0xff]
    %v183 = vld [vmem:[#allocation9 + $0x28] sm:$0xff]
    %v184 = vld [vmem:[#allocation9 + $0x30] sm:$0xff]
    %v185 = vld [vmem:[#allocation9 + $0x38] sm:$0xff]
    %v186 = vld [vmem:[#allocation9 + $0x40] sm:$0xff]
    %v187 = vld [vmem:[#allocation9 + $0x48] sm:$0xff]
    %v188 = vld [vmem:[#allocation9 + $0x50] sm:$0xff]
    %v189 = vld [vmem:[#allocation9 + $0x58] sm:$0xff]
    %v190 = vld [vmem:[#allocation9 + $0x60] sm:$0xff]
    %v191 = vld [vmem:[#allocation9 + $0x68] sm:$0xff]
    %v192 = vld [vmem:[#allocation9 + $0x70] sm:$0xff]
    %v193 = vld [vmem:[#allocation9 + $0x78] sm:$0xff]
    %v194 = vld [vmem:[#allocation9 + $0x80] sm:$0xff]
    %v195 = vld [vmem:[#allocation9 + $0x88] sm:$0xff]
    %v196 = vld [vmem:[#allocation9 + $0x90] sm:$0xff]
    %v197 = vld [vmem:[#allocation9 + $0x98] sm:$0xff]
    %v198 = vld [vmem:[#allocation9 + $0xa0] sm:$0xff]
    %v199 = vld [vmem:[#allocation9 + $0xa8] sm:$0xff]
    %v200 = vld [vmem:[#allocation9 + $0xb0] sm:$0xff]
    %v201 = vld [vmem:[#allocation9 + $0xb8] sm:$0xff]
    %v202 = vld [vmem:[#allocation9 + $0xc0] sm:$0xff]
    %v203 = vld [vmem:[#allocation9 + $0xc8] sm:$0xff]
    %v204 = vld [vmem:[#allocation9 + $0xd0] sm:$0xff]
    %v205 = vld [vmem:[#allocation9 + $0xd8] sm:$0xff]
    %v206 = vld [vmem:[#allocation9 + $0xe0] sm:$0xff]
    %v207 = vld [vmem:[#allocation9 + $0xe8] sm:$0xff]
    %v208 = vld [vmem:[#allocation9 + $0xf0] sm:$0xff]
    %v209 = vld [vmem:[#allocation9 + $0xf8] sm:$0xff]
    %v210 = vld [vmem:[%s5] sm:$0x3]
    %v212 = vlaneseq
    %v213 = vshrl.u32 %v212, 7
    %v214 = vsub.s32 0, %v213
    %v215 = vrot.slane %v210, %v214
    %v216 = vlaneseq
    %v217 = vshrl.u32 %v216, 7
    %v218 = vsub.s32 1, %v217
    %v219 = vrot.slane %v210, %v218
    %v254 = vunpack.c.l.b16 %v178
    %v255 = vunpack.c.h.b16 %v178
    %v256 = vunpack.c.l.b16 %v179
    %v257 = vunpack.c.h.b16 %v179
    %v258 = vunpack.c.l.b16 %v180
    %v259 = vunpack.c.h.b16 %v180
    %v260 = vunpack.c.l.b16 %v181
    %v261 = vunpack.c.h.b16 %v181
    %v262 = vunpack.c.l.b16 %v182
    %v263 = vunpack.c.h.b16 %v182
    %v264 = vunpack.c.l.b16 %v183
    %v265 = vunpack.c.h.b16 %v183
    %v266 = vunpack.c.l.b16 %v184
    %v267 = vunpack.c.h.b16 %v184
    %v268 = vunpack.c.l.b16 %v185
    %v269 = vunpack.c.h.b16 %v185
    %v270 = vunpack.c.l.b16 %v186
    %v271 = vunpack.c.h.b16 %v186
    %v272 = vunpack.c.l.b16 %v187
    %v273 = vunpack.c.h.b16 %v187
    %v274 = vunpack.c.l.b16 %v188
    %v275 = vunpack.c.h.b16 %v188
    %v276 = vunpack.c.l.b16 %v189
    %v277 = vunpack.c.h.b16 %v189
    %v278 = vunpack.c.l.b16 %v190
    %v279 = vunpack.c.h.b16 %v190
    %v280 = vunpack.c.l.b16 %v191
    %v281 = vunpack.c.h.b16 %v191
    %v282 = vunpack.c.l.b16 %v192
    %v283 = vunpack.c.h.b16 %v192
    %v284 = vunpack.c.l.b16 %v193
    %v285 = vunpack.c.h.b16 %v193
    %v286 = vunpack.c.l.b16 %v194
    %v287 = vunpack.c.h.b16 %v194
    %v288 = vunpack.c.l.b16 %v195
    %v289 = vunpack.c.h.b16 %v195
    %v290 = vunpack.c.l.b16 %v196
    %v291 = vunpack.c.h.b16 %v196
    %v292 = vunpack.c.l.b16 %v197
    %v293 = vunpack.c.h.b16 %v197
    %v294 = vunpack.c.l.b16 %v198
    %v295 = vunpack.c.h.b16 %v198
    %v296 = vunpack.c.l.b16 %v199
    %v297 = vunpack.c.h.b16 %v199
    %v298 = vunpack.c.l.b16 %v200
    %v299 = vunpack.c.h.b16 %v200
    %v300 = vunpack.c.l.b16 %v201
    %v301 = vunpack.c.h.b16 %v201
    %v302 = vunpack.c.l.b16 %v202
    %v303 = vunpack.c.h.b16 %v202
    %v304 = vunpack.c.l.b16 %v203
    %v305 = vunpack.c.h.b16 %v203
    %v306 = vunpack.c.l.b16 %v204
    %v307 = vunpack.c.h.b16 %v204
    %v308 = vunpack.c.l.b16 %v205
    %v309 = vunpack.c.h.b16 %v205
    %v310 = vunpack.c.l.b16 %v206
    %v311 = vunpack.c.h.b16 %v206
    %v312 = vunpack.c.l.b16 %v207
    %v313 = vunpack.c.h.b16 %v207
    %v314 = vunpack.c.l.b16 %v208
    %v315 = vunpack.c.h.b16 %v208
    %v316 = vunpack.c.l.b16 %v209
    %v317 = vunpack.c.h.b16 %v209
    %v318 = vpack.c.b16 %v256, %v254
    %v319 = vpack.c.b16 %v257, %v255
    %v320 = vpack.c.b16 %v260, %v258
    %v321 = vpack.c.b16 %v261, %v259
    %v322 = vpack.c.b16 %v264, %v262
    %v323 = vpack.c.b16 %v265, %v263
    %v324 = vpack.c.b16 %v268, %v266
    %v325 = vpack.c.b16 %v269, %v267
    %v326 = vpack.c.b16 %v272, %v270
    %v327 = vpack.c.b16 %v273, %v271
    %v328 = vpack.c.b16 %v276, %v274
    %v329 = vpack.c.b16 %v277, %v275
    %v330 = vpack.c.b16 %v280, %v278
    %v331 = vpack.c.b16 %v281, %v279
    %v332 = vpack.c.b16 %v284, %v282
    %v333 = vpack.c.b16 %v285, %v283
    %v334 = vpack.c.b16 %v288, %v286
    %v335 = vpack.c.b16 %v289, %v287
    %v336 = vpack.c.b16 %v292, %v290
    %v337 = vpack.c.b16 %v293, %v291
    %v338 = vpack.c.b16 %v296, %v294
    %v339 = vpack.c.b16 %v297, %v295
    %v340 = vpack.c.b16 %v300, %v298
    %v341 = vpack.c.b16 %v301, %v299
    %v342 = vpack.c.b16 %v304, %v302
    %v343 = vpack.c.b16 %v305, %v303
    %v344 = vpack.c.b16 %v308, %v306
    %v345 = vpack.c.b16 %v309, %v307
    %v346 = vpack.c.b16 %v312, %v310
    %v347 = vpack.c.b16 %v313, %v311
    %v348 = vpack.c.b16 %v316, %v314
    %v349 = vpack.c.b16 %v317, %v315
    %382 = vmatprep.subr.bf16.mxu0 %v319
    %383 = vmatpush1.bf16.msra.mxu0 %v318
    %384 = vmatprep.subr.bf16.mxu0 %v321
    %385 = vmatpush1.bf16.msra.mxu0 %v320
    %386 = vmatprep.subr.bf16.mxu0 %v323
    %387 = vmatpush1.bf16.msra.mxu0 %v322
    %388 = vmatprep.subr.bf16.mxu0 %v325
    %389 = vmatpush1.bf16.msra.mxu0 %v324
    %390 = vmatprep.subr.bf16.mxu0 %v327
    %391 = vmatpush1.bf16.msra.mxu0 %v326
    %392 = vmatprep.subr.bf16.mxu0 %v329
    %393 = vmatpush1.bf16.msra.mxu0 %v328
    %394 = vmatprep.subr.bf16.mxu0 %v331
    %395 = vmatpush1.bf16.msra.mxu0 %v330
    %396 = vmatprep.subr.bf16.mxu0 %v333
    %397 = vmatpush1.bf16.msra.mxu0 %v332
    %398 = vmatprep.subr.bf16.mxu0 %v335
    %399 = vmatpush1.bf16.msra.mxu0 %v334
    %400 = vmatprep.subr.bf16.mxu0 %v337
    %401 = vmatpush1.bf16.msra.mxu0 %v336
    %402 = vmatprep.subr.bf16.mxu0 %v339
    %403 = vmatpush1.bf16.msra.mxu0 %v338
    %404 = vmatprep.subr.bf16.mxu0 %v341
    %405 = vmatpush1.bf16.msra.mxu0 %v340
    %406 = vmatprep.subr.bf16.mxu0 %v343
    %407 = vmatpush1.bf16.msra.mxu0 %v342
    %408 = vmatprep.subr.bf16.mxu0 %v345
    %409 = vmatpush1.bf16.msra.mxu0 %v344
    %410 = vmatprep.subr.bf16.mxu0 %v347
    %411 = vmatpush1.bf16.msra.mxu0 %v346
    %412 = vmatprep.subr.bf16.mxu0 %v349
    %413 = vmatpush1.bf16.msra.mxu0 %v348
    %414 = vmatprep.mubr.bf16.mxu0 %v177
    %415 = vmatmul.mubr.bf16.gmra.mrb[0].mxu0 %v176
    %v416 = vpop.f32.mrb[0].mxu0
    %v417 = vadd.f32 %v215, %v416
    %v418 = vpop.f32.mrb[0].mxu0
    %v419 = vadd.f32 %v219, %v418
    %v420 = vpop.f32.mrb[0].mxu0
    %v421 = vpop.f32.mrb[0].mxu0
    %422 = vdwg.mxu0
    %v423 = vmax.f32 %v417, 0.0
    %v424 = vmax.f32 %v419, 0.0
    %v425 = vld [vmem:[%s6] sm:$0x3]
    %v426 = vpack.c.bf16 %v423, %v423
    %v427 = vpack.c.bf16 %v424, %v424
    %v428 = vld [vmem:[#allocation2] sm:$0x1]
    %430 = vset.pattern.permute.xlu0 0
    %431 = vperm.xlu0 %430, %v428
    %v432 = vpop.permute.xlu0 %431
    %v434 = vlaneseq
    %v435 = vshrl.u32 %v434, 7
    %v436 = vsub.s32 0, %v435
    %v437 = vrot.slane %v432, %v436
    %v440 = vunpack.c.l.s4 1966171168
    %v441 = vunpack.c.0.s8 %v440
    %v442 = vlaneseq
    %v443 = vshrl.u32 %v442, 7
    %v444 = vsub.s32 %v441, %v443
    %v445 = vrot.slane %v425, %v444
    %v446 = vcombine.high %v445, %v445
    %v448 = vunpack.c.l.s4 1966171168
    %v449 = vunpack.c.0.s8 %v448
    %v450 = vlaneseq
    %v451 = vshrl.u32 %v450, 7
    %v452 = vsub.s32 %v449, %v451
    %v453 = vrot.slane %v445, %v452
    %v455 = vunpack.c.l.s4 1966171168
    %v456 = vunpack.c.0.s8 %v455
    %v457 = vlaneseq
    %v458 = vshrl.u32 %v457, 7
    %v459 = vsub.s32 %v456, %v458
    %v460 = vrot.slane %v446, %v459
    %463 = vmatprep.subr.bf16.mxu0 %v427
    %464 = vmatpush1.bf16.xpose.msra.mxu0 %v426
    %465 = vmatprep.subr.bf16.mxu0 0
    %466 = vmatpush1.bf16.xpose.msra.mxu0 0
    %467 = vmatprep.subr.bf16.mxu0 0
    %468 = vmatpush1.bf16.xpose.msra.mxu0 0
    %469 = vmatprep.subr.bf16.mxu0 0
    %470 = vmatpush1.bf16.xpose.msra.mxu0 0
    %471 = vmatprep.subr.bf16.mxu0 0
    %472 = vmatpush1.bf16.xpose.msra.mxu0 0
    %473 = vmatprep.subr.bf16.mxu0 0
    %474 = vmatpush1.bf16.xpose.msra.mxu0 0
    %475 = vmatprep.subr.bf16.mxu0 0
    %476 = vmatpush1.bf16.xpose.msra.mxu0 0
    %477 = vmatprep.subr.bf16.mxu0 0
    %478 = vmatpush1.bf16.xpose.msra.mxu0 0
    %479 = vmatprep.subr.bf16.mxu0 0
    %480 = vmatpush1.bf16.xpose.msra.mxu0 0
    %481 = vmatprep.subr.bf16.mxu0 0
    %482 = vmatpush1.bf16.xpose.msra.mxu0 0
    %483 = vmatprep.subr.bf16.mxu0 0
    %484 = vmatpush1.bf16.xpose.msra.mxu0 0
    %485 = vmatprep.subr.bf16.mxu0 0
    %486 = vmatpush1.bf16.xpose.msra.mxu0 0
    %487 = vmatprep.subr.bf16.mxu0 0
    %488 = vmatpush1.bf16.xpose.msra.mxu0 0
    %489 = vmatprep.subr.bf16.mxu0 0
    %490 = vmatpush1.bf16.xpose.msra.mxu0 0
    %491 = vmatprep.subr.bf16.mxu0 0
    %492 = vmatpush1.bf16.xpose.msra.mxu0 0
    %493 = vmatprep.subr.bf16.mxu0 0
    %494 = vmatpush1.bf16.xpose.msra.mxu0 0
    %495 = vmatprep.mubr.bf16.mxu0 %v460
    %496 = vmatmul.mubr.bf16.gmra.mrb[0].mxu0 %v453
    %v497 = vpop.f32.mrb[0].mxu0
    %v498 = vadd.f32 %v437, %v497
    %v499 = vpop.f32.mrb[0].mxu0
    %v500 = vpop.f32.mrb[0].mxu0
    %v501 = vpop.f32.mrb[0].mxu0
    %502 = vdwg.mxu0
    %vm503 = vcmask 57344
    %504 = vst.msk [vmem:[#allocation11] sm:$0x1] %vm503, %v498
    // Predicated region
    $region50: #{critic_forward.1} parent=1 // pred_check
      _
    $region51: #{critic_forward.1} parent=1 // pred_check_branch
      %506 = sbr.rel (0) target = $region53
    $region52: #{critic_forward.1} parent=1 // pred_region
      %s508 = ssub.s32 16, 16
      %509 = vsyncadd [#allocation5], %s508
      %s511 = sshll.u32 [#allocation11], 4
      %s512 = int_to_ptr.vmem [resolvable:$true] %s511
      %514 = dma.vmem_to_hbm [thread:$0]  %s512, 16, %s8, [#allocation5]
    $region53: #{critic_forward.1} parent=1 // pred_fallthru
      _
    // Predicated region
    $region54: #{critic_forward.1} parent=1 // pred_check
      _
    $region55: #{critic_forward.1} parent=1 // pred_check_branch
      %516 = sbr.rel (0) target = $region57
    $region56: #{critic_forward.1} parent=1 // pred_region
      %517 = dma.done [#allocation5], 16
    $region57: #{critic_forward.1} parent=1 // pred_fallthru
      _
    %518 = vsyncpa [#allocation4], 1
    %519 = vsyncpa [#allocation7], 1
    %520 = vsyncpa [#allocation10], 1
    %521 = vsyncpa [#allocation5], 1

</llo_original>
